<compile_context>
chip_gen: v7x
topology: tpu7x:2x2x1
jax: 0.10.0
libtpu: 0.0.40
codegen_flags: <defaults>
</compile_context>

<pallas_src>
import jax
import jax.numpy as jnp
from jax.experimental import pallas as pl
from jax.experimental.pallas import tpu as pltpu

REG_FOLD = 1.0   # constructor arg
EPS = 0.01       # registered buffer 'eps'
ZERO = 0.0       # registered buffer 'zero'
# buffers 'eye' (2x2 identity) and 'one' are folded into the analytic formulas.

LANE = 128
MAX_TILE_ROWS = 1024          # 1024 rows x 128 lanes = 131072 points / tile
SMALL_N_THRESHOLD = 32 * 1024  # below this the pallas_call is pure fixed cost


def _cdiv(a, b):
    return -(-a // b)


def _round_up(x, m):
    return _cdiv(x, m) * m


def _num_parallel_cores():
    """v5e/v6e have 1 TensorCore/chip (leading parallel axis = pure overhead);
    v7x has 2.  Best-effort detection, falling back to 1 (always correct)."""
    try:
        kind = jax.devices()[0].device_kind.lower()
    except Exception:
        return 1
    return 2 if ("v7" in kind or "tpu7" in kind) else 1


def _safe_recip(x):
    """1/x on the EUP (its own VLIW slot) + one Newton step for ~f32 accuracy.

    Guarded so x == 0 (degenerate / folded element) returns the EUP result
    (+inf) like exact division would, instead of NaN from inf * 0 in the
    Newton step (correctness concern from the review)."""
    r = pl.reciprocal(x, approx=True)
    return jnp.where(x == 0.0, r, r * (2.0 - x * r))


def _make_kernel(tile_rows, inner_tiles, n_true, reg_fold):
    tile_pts = tile_rows * LANE

    def kernel(a_ref, b_ref, c_ref, d_ref,
               f00_ref, f01_ref, f10_ref, f11_ref, f20_ref, f21_ref,
               acc_ref):
        # *_ref   : (tile_rows, 128) lane-dense component slabs
        # acc_ref : (1, tile_rows, 128) resident partial-sum accumulator
        p = pl.program_id(0)
        i = pl.program_id(1)

        @pl.when(i == 0)
        def _():
            acc_ref[...] = jnp.zeros_like(acc_ref)

        a, b = a_ref[...], b_ref[...]
        c, d = c_ref[...], d_ref[...]
        f00, f01 = f00_ref[...], f01_ref[...]
        f10, f11 = f10_ref[...], f11_ref[...]
        f20, f21 = f20_ref[...], f21_ref[...]

        det_h = a * d - b * c

        # G = J_f @ adj(J_h) with adj(J_h) = [[d, -b], [-c, a]]  (no division)
        g00 = f00 * d - f01 * c
        g01 = f01 * a - f00 * b
        g10 = f10 * d - f11 * c
        g11 = f11 * a - f10 * b
        g20 = f20 * d - f21 * c
        g21 = f21 * a - f20 * b

        # G^T G entries (symmetric 2x2)
        s0 = g00 * g00 + g10 * g10 + g20 * g20
        s1 = g01 * g01 + g11 * g11 + g21 * g21
        sx = g00 * g01 + g10 * g11 + g20 * g21
        tr_g = s0 + s1
        det_g = s0 * s1 - sx * sx

        det_h2 = det_h * det_h
        inv_det_h2 = _safe_recip(det_h2)
        inv_det_g = _safe_recip(det_g)

        # FFF = G^T G / det_h^2
        #   trace(FFF)      = tr_g / det_h^2
        #   trace(FFF^{-1}) = trace(FFF) / det(FFF) = tr_g * det_h^2 / det_g
        # TODO(synk): distortion() is abstract in BaseParametrizationLoss; using
        # symmetric Dirichlet trace(FFF) + trace(FFF^{-1}) as the concrete ppd.
        ppd = tr_g * inv_det_h2 + tr_g * det_h2 * inv_det_g

        # TODO(synk): compute_fold_reg() comes from DifferentialLossMixin; using
        # a hinge on det(J_h): max(zero, eps - det(J_h)).
        pp_fold = jnp.maximum(ZERO, EPS - det_h)

        per_point = ppd + reg_fold * pp_fold              # (tile_rows, 128)

        start_pt = (p * inner_tiles + i) * tile_pts       # scalar

        # Hot path: tile fully inside [0, N) -> no mask work at all.
        @pl.when(start_pt + tile_pts <= n_true)
        def _():
            acc_ref[...] += per_point[None, :, :]

        # Cold path: only tiles straddling (or past) N pay for the mask.
        @pl.when(start_pt + tile_pts > n_true)
        def _():
            row = jax.lax.broadcasted_iota(jnp.int32, (tile_rows, LANE), 0)
            lane = jax.lax.broadcasted_iota(jnp.int32, (tile_rows, LANE), 1)
            valid = (start_pt + row * LANE + lane) < n_true
            acc_ref[...] += jnp.where(valid, per_point, 0.0)[None, :, :]

    return kernel


def _pallas_loss(comps, n_true, reg_fold, max_tile_rows=MAX_TILE_ROWS):
    """comps: list of 10 (N,) float32 Jacobian component arrays."""
    m = _cdiv(n_true, LANE)
    n_pad = m * LANE

    # Safe pad values (J_h = I, J_f = [I; 0]) keep padded lanes finite; they are
    # masked to zero inside the kernel regardless.  No pad copy when aligned.
    safe = (1.0, 0.0, 0.0, 1.0, 1.0, 0.0, 0.0, 1.0, 0.0, 0.0)
    slabs = []
    for comp, val in zip(comps, safe):
        if n_pad != n_true:
            comp = jnp.pad(comp, (0, n_pad - n_true), constant_values=val)
        slabs.append(comp.reshape(m, LANE))

    p_cores = _num_parallel_cores()
    tile_rows = max(8, min(_round_up(max_tile_rows, 8),
                           _round_up(_cdiv(m, p_cores), 8)))
    tiles_total = _cdiv(m, tile_rows)
    inner_tiles = _cdiv(tiles_total, p_cores)
    last_block = tiles_total - 1   # clamp logical tiles past the array end

    def in_map(p, i):
        # Clamp fully-out-of-range logical tiles (possible only when the core
        # split is ragged) onto the last valid block; they are fully masked.
        return (jnp.minimum(p * inner_tiles + i, last_block), 0)

    in_spec = pl.BlockSpec((tile_rows, LANE), in_map)
    out_spec = pl.BlockSpec((1, tile_rows, LANE), lambda p, i: (p, 0, 0))

    if p_cores > 1:
        lead_sem = getattr(pltpu, "CORE_PARALLEL", pltpu.PARALLEL)  # v7x: 2 TCs
    else:
        lead_sem = pltpu.ARBITRARY  # size-1 axis on v5e/v6e, effectively free

    kernel = _make_kernel(tile_rows, inner_tiles, n_true, reg_fold)
    partial = pl.pallas_call(
        kernel,
        out_shape=jax.ShapeDtypeStruct((p_cores, tile_rows, LANE), jnp.float32),
        grid=(p_cores, inner_tiles),
        in_specs=[in_spec] * 10,
        out_specs=out_spec,
        compiler_params=pltpu.CompilerParams(
            dimension_semantics=(lead_sem, pltpu.ARBITRARY)),
    )(*slabs)
    # Single cross-lane reduction + mean, once, outside the hot loop.
    return jnp.sum(partial) / jnp.float32(n_true)


def _dense_loss(J_f, J_h, reg_fold):
    """Pure-JAX per-point math (small-N fast path and reference)."""
    J_h_inv = jnp.linalg.inv(J_h)
    J = J_f @ J_h_inv
    FFF = jnp.swapaxes(J, 1, 2) @ J
    tr = FFF[:, 0, 0] + FFF[:, 1, 1]
    det_F = FFF[:, 0, 0] * FFF[:, 1, 1] - FFF[:, 0, 1] * FFF[:, 1, 0]
    ppd = tr + tr / det_F
    det_h = J_h[:, 0, 0] * J_h[:, 1, 1] - J_h[:, 0, 1] * J_h[:, 1, 0]
    pp_fold = jnp.maximum(ZERO, EPS - det_h)
    return jnp.mean(ppd + reg_fold * pp_fold)


def base_parametrization_loss(source, f_points3d, h_mapped, reg_fold=REG_FOLD,
                              use_pallas=None, max_tile_rows=MAX_TILE_ROWS):
    """Mirrors BaseParametrizationLoss.forward(points_3D, source, mapped).

    points_3D / mapped are produced from `source`; the autograd
    `self.gradient(y, x)` calls are realized with one vmapped jacfwd per
    function (single primal evaluation each).
    """
    n = source.shape[0]
    if use_pallas is None:
        use_pallas = n >= SMALL_N_THRESHOLD

    J_h = jax.vmap(jax.jacfwd(h_mapped))(source)      # (N, 2, 2)
    J_f = jax.vmap(jax.jacfwd(f_points3d))(source)    # (N, 3, 2)

    if not use_pallas:
        return _dense_loss(J_f.astype(jnp.float32), J_h.astype(jnp.float32),
                           float(reg_fold))

    comps = [
        J_h[:, 0, 0], J_h[:, 0, 1],      # a = dh0/du, b = dh0/dv
        J_h[:, 1, 0], J_h[:, 1, 1],      # c = dh1/du, d = dh1/dv
        J_f[:, 0, 0], J_f[:, 0, 1],      # f00, f01
        J_f[:, 1, 0], J_f[:, 1, 1],      # f10, f11
        J_f[:, 2, 0], J_f[:, 2, 1],      # f20, f21
    ]
    comps = [x.astype(jnp.float32) for x in comps]
    return _pallas_loss(comps, n, float(reg_fold), max_tile_rows)


def _reference_loss(source, f_points3d, h_mapped, reg_fold=REG_FOLD):
    """Pure-JAX mirror of the PyTorch math (sanity check)."""
    J_f = jax.vmap(jax.jacfwd(f_points3d))(source)
    J_h = jax.vmap(jax.jacfwd(h_mapped))(source)
    return _dense_loss(J_f.astype(jnp.float32), J_h.astype(jnp.float32),
                       float(reg_fold))


if __name__ == "__main__":
    key = jax.random.PRNGKey(0)

    A = jnp.array([[1.2, 0.3], [0.1, 0.9]], dtype=jnp.float32)

    def h_mapped(uv):      # 2D -> 2D mapping (invertible-ish)
        return A @ uv + 0.05 * jnp.array([jnp.sin(3.0 * uv[1]),
                                          jnp.cos(3.0 * uv[0])])

    def f_points3d(uv):    # 2D -> 3D surface embedding
        return jnp.array([uv[0], uv[1],
                          0.3 * jnp.sin(uv[0]) * jnp.cos(uv[1])])

    # (N, max_tile_rows): aligned single-tile, ragged masked last tile, and a
    # forced multi-tile inner reduction.  use_pallas=True so the kernel runs
    # even though these demo sizes are below the small-N fast-path threshold.
    cases = ((4096, MAX_TILE_ROWS), (1000, MAX_TILE_ROWS), (4096, 8))
    for n, mtr in cases:
        src = jax.random.normal(jax.random.fold_in(key, n + mtr), (n, 2),
                                dtype=jnp.float32)
        loss = jax.block_until_ready(base_parametrization_loss(
            src, f_points3d, h_mapped, reg_fold=1.0,
            use_pallas=True, max_tile_rows=mtr))
        ref = jax.block_until_ready(
            _reference_loss(src, f_points3d, h_mapped, reg_fold=1.0))
        assert jnp.isfinite(loss), ("non-finite loss", n, mtr, loss)
        assert jnp.allclose(loss, ref, rtol=1e-3, atol=1e-4), (n, mtr, loss, ref)
    print("KERNEL_OK")
</pallas_src>

<mosaic_0001>
module attributes {stable_mosaic.version = 11 : i64} {
  func.func @kernel(%arg0: i32, %arg1: i32, %arg2: memref<32x128xf32, #tpu.memory_space<vmem>>, %arg3: memref<32x128xf32, #tpu.memory_space<vmem>>, %arg4: memref<32x128xf32, #tpu.memory_space<vmem>>, %arg5: memref<32x128xf32, #tpu.memory_space<vmem>>, %arg6: memref<32x128xf32, #tpu.memory_space<vmem>>, %arg7: memref<32x128xf32, #tpu.memory_space<vmem>>, %arg8: memref<32x128xf32, #tpu.memory_space<vmem>>, %arg9: memref<32x128xf32, #tpu.memory_space<vmem>>, %arg10: memref<32x128xf32, #tpu.memory_space<vmem>>, %arg11: memref<32x128xf32, #tpu.memory_space<vmem>>, %arg12: memref<1x32x128xf32, #tpu.memory_space<vmem>>) attributes {dimension_semantics = [#tpu.dimension_semantics<arbitrary>, #tpu.dimension_semantics<arbitrary>], iteration_bounds = array<i64: 1, 1>, scalar_prefetch = 0 : i64, scratch_operands = 0 : i64, tpu.core_type = #tpu.core_type<tc>, window_params = [{transform_indices = @transform_0, window_bounds = array<i64: 32, 128>}, {transform_indices = @transform_1, window_bounds = array<i64: 32, 128>}, {transform_indices = @transform_2, window_bounds = array<i64: 32, 128>}, {transform_indices = @transform_3, window_bounds = array<i64: 32, 128>}, {transform_indices = @transform_4, window_bounds = array<i64: 32, 128>}, {transform_indices = @transform_5, window_bounds = array<i64: 32, 128>}, {transform_indices = @transform_6, window_bounds = array<i64: 32, 128>}, {transform_indices = @transform_7, window_bounds = array<i64: 32, 128>}, {transform_indices = @transform_8, window_bounds = array<i64: 32, 128>}, {transform_indices = @transform_9, window_bounds = array<i64: 32, 128>}, {transform_indices = @transform_10, window_bounds = array<i64: 1, 32, 128>}]} {
    %c0_i32 = arith.constant 0 : i32
    %0 = arith.cmpi eq, %arg1, %c0_i32 : i32
    %1 = arith.extui %0 : i1 to i32
    %c0_i32_0 = arith.constant 0 : i32
    %2 = arith.cmpi ne, %1, %c0_i32_0 : i32
    scf.if %2 {
      %cst_32 = arith.constant 0.000000e+00 : f32
      %92 = vector.broadcast %cst_32 : f32 to vector<1x32x128xf32>
      %c0_33 = arith.constant 0 : index
      %c0_34 = arith.constant 0 : index
      %c0_35 = arith.constant 0 : index
      %93 = vector.load %arg12[%c0_33, %c0_34, %c0_35] : memref<1x32x128xf32, #tpu.memory_space<vmem>>, vector<1x32x128xf32>
      tpu.vector_store %arg12[%c0_33, %c0_34, %c0_35], %92 {strides = array<i32>} : memref<1x32x128xf32, #tpu.memory_space<vmem>>, vector<1x32x128xf32>,
    } else {
    }
    %c0 = arith.constant 0 : index
    %c0_1 = arith.constant 0 : index
    %3 = vector.load %arg2[%c0, %c0_1] : memref<32x128xf32, #tpu.memory_space<vmem>>, vector<32x128xf32>
    %c0_2 = arith.constant 0 : index
    %c0_3 = arith.constant 0 : index
    %4 = vector.load %arg3[%c0_2, %c0_3] : memref<32x128xf32, #tpu.memory_space<vmem>>, vector<32x128xf32>
    %c0_4 = arith.constant 0 : index
    %c0_5 = arith.constant 0 : index
    %5 = vector.load %arg4[%c0_4, %c0_5] : memref<32x128xf32, #tpu.memory_space<vmem>>, vector<32x128xf32>
    %c0_6 = arith.constant 0 : index
    %c0_7 = arith.constant 0 : index
    %6 = vector.load %arg5[%c0_6, %c0_7] : memref<32x128xf32, #tpu.memory_space<vmem>>, vector<32x128xf32>
    %c0_8 = arith.constant 0 : index
    %c0_9 = arith.constant 0 : index
    %7 = vector.load %arg6[%c0_8, %c0_9] : memref<32x128xf32, #tpu.memory_space<vmem>>, vector<32x128xf32>
    %c0_10 = arith.constant 0 : index
    %c0_11 = arith.constant 0 : index
    %8 = vector.load %arg7[%c0_10, %c0_11] : memref<32x128xf32, #tpu.memory_space<vmem>>, vector<32x128xf32>
    %c0_12 = arith.constant 0 : index
    %c0_13 = arith.constant 0 : index
    %9 = vector.load %arg8[%c0_12, %c0_13] : memref<32x128xf32, #tpu.memory_space<vmem>>, vector<32x128xf32>
    %c0_14 = arith.constant 0 : index
    %c0_15 = arith.constant 0 : index
    %10 = vector.load %arg9[%c0_14, %c0_15] : memref<32x128xf32, #tpu.memory_space<vmem>>, vector<32x128xf32>
    %c0_16 = arith.constant 0 : index
    %c0_17 = arith.constant 0 : index
    %11 = vector.load %arg10[%c0_16, %c0_17] : memref<32x128xf32, #tpu.memory_space<vmem>>, vector<32x128xf32>
    %c0_18 = arith.constant 0 : index
    %c0_19 = arith.constant 0 : index
    %12 = vector.load %arg11[%c0_18, %c0_19] : memref<32x128xf32, #tpu.memory_space<vmem>>, vector<32x128xf32>
    %13 = arith.mulf %3, %6 : vector<32x128xf32>
    %14 = arith.mulf %4, %5 : vector<32x128xf32>
    %15 = arith.subf %13, %14 : vector<32x128xf32>
    %16 = arith.mulf %7, %6 : vector<32x128xf32>
    %17 = arith.mulf %8, %5 : vector<32x128xf32>
    %18 = arith.subf %16, %17 : vector<32x128xf32>
    %19 = arith.mulf %8, %3 : vector<32x128xf32>
    %20 = arith.mulf %7, %4 : vector<32x128xf32>
    %21 = arith.subf %19, %20 : vector<32x128xf32>
    %22 = arith.mulf %9, %6 : vector<32x128xf32>
    %23 = arith.mulf %10, %5 : vector<32x128xf32>
    %24 = arith.subf %22, %23 : vector<32x128xf32>
    %25 = arith.mulf %10, %3 : vector<32x128xf32>
    %26 = arith.mulf %9, %4 : vector<32x128xf32>
    %27 = arith.subf %25, %26 : vector<32x128xf32>
    %28 = arith.mulf %11, %6 : vector<32x128xf32>
    %29 = arith.mulf %12, %5 : vector<32x128xf32>
    %30 = arith.subf %28, %29 : vector<32x128xf32>
    %31 = arith.mulf %12, %3 : vector<32x128xf32>
    %32 = arith.mulf %11, %4 : vector<32x128xf32>
    %33 = arith.subf %31, %32 : vector<32x128xf32>
    %34 = arith.mulf %18, %18 : vector<32x128xf32>
    %35 = arith.mulf %24, %24 : vector<32x128xf32>
    %36 = arith.addf %34, %35 : vector<32x128xf32>
    %37 = arith.mulf %30, %30 : vector<32x128xf32>
    %38 = arith.addf %36, %37 : vector<32x128xf32>
    %39 = arith.mulf %21, %21 : vector<32x128xf32>
    %40 = arith.mulf %27, %27 : vector<32x128xf32>
    %41 = arith.addf %39, %40 : vector<32x128xf32>
    %42 = arith.mulf %33, %33 : vector<32x128xf32>
    %43 = arith.addf %41, %42 : vector<32x128xf32>
    %44 = arith.mulf %18, %21 : vector<32x128xf32>
    %45 = arith.mulf %24, %27 : vector<32x128xf32>
    %46 = arith.addf %44, %45 : vector<32x128xf32>
    %47 = arith.mulf %30, %33 : vector<32x128xf32>
    %48 = arith.addf %46, %47 : vector<32x128xf32>
    %49 = arith.addf %38, %43 : vector<32x128xf32>
    %50 = arith.mulf %38, %43 : vector<32x128xf32>
    %51 = arith.mulf %48, %48 : vector<32x128xf32>
    %52 = arith.subf %50, %51 : vector<32x128xf32>
    %53 = arith.mulf %15, %15 : vector<32x128xf32>
    %54 = tpu.reciprocal %53 {approx = true} : vector<32x128xf32> -> vector<32x128xf32>
    %cst = arith.constant 0.000000e+00 : f32
    %55 = vector.broadcast %cst : f32 to vector<32x128xf32>
    %56 = arith.cmpf oeq, %53, %55 : vector<32x128xf32>
    %57 = arith.mulf %53, %54 : vector<32x128xf32>
    %cst_20 = arith.constant 2.000000e+00 : f32
    %58 = vector.broadcast %cst_20 : f32 to vector<32x128xf32>
    %59 = arith.subf %58, %57 : vector<32x128xf32>
    %60 = arith.mulf %54, %59 : vector<32x128xf32>
    %61 = arith.select %56, %54, %60 : vector<32x128xi1>, vector<32x128xf32>
    %62 = tpu.reciprocal %52 {approx = true} : vector<32x128xf32> -> vector<32x128xf32>
    %cst_21 = arith.constant 0.000000e+00 : f32
    %63 = vector.broadcast %cst_21 : f32 to vector<32x128xf32>
    %64 = arith.cmpf oeq, %52, %63 : vector<32x128xf32>
    %65 = arith.mulf %52, %62 : vector<32x128xf32>
    %cst_22 = arith.constant 2.000000e+00 : f32
    %66 = vector.broadcast %cst_22 : f32 to vector<32x128xf32>
    %67 = arith.subf %66, %65 : vector<32x128xf32>
    %68 = arith.mulf %62, %67 : vector<32x128xf32>
    %69 = arith.select %64, %62, %68 : vector<32x128xi1>, vector<32x128xf32>
    %70 = arith.mulf %49, %61 : vector<32x128xf32>
    %71 = arith.mulf %49, %53 : vector<32x128xf32>
    %72 = arith.mulf %71, %69 : vector<32x128xf32>
    %73 = arith.addf %70, %72 : vector<32x128xf32>
    %cst_23 = arith.constant 0.00999999977 : f32
    %74 = vector.broadcast %cst_23 : f32 to vector<32x128xf32>
    %75 = arith.subf %74, %15 : vector<32x128xf32>
    %cst_24 = arith.constant 0.000000e+00 : f32
    %76 = vector.broadcast %cst_24 : f32 to vector<32x128xf32>
    %77 = arith.maximumf %76, %75 : vector<32x128xf32>
    %cst_25 = arith.constant 1.000000e+00 : f32
    %78 = vector.broadcast %cst_25 : f32 to vector<32x128xf32>
    %79 = arith.mulf %78, %77 : vector<32x128xf32>
    %80 = arith.addf %73, %79 : vector<32x128xf32>
    %c1_i32 = arith.constant 1 : i32
    %81 = arith.muli %arg0, %c1_i32 : i32
    %82 = arith.addi %81, %arg1 : i32
    %c4096_i32 = arith.constant 4096 : i32
    %83 = arith.muli %82, %c4096_i32 : i32
    %c4096_i32_26 = arith.constant 4096 : i32
    %84 = arith.addi %83, %c4096_i32_26 : i32
    %c4096_i32_27 = arith.constant 4096 : i32
    %85 = arith.cmpi sle, %84, %c4096_i32_27 : i32
    %86 = arith.extui %85 : i1 to i32
    %c0_i32_28 = arith.constant 0 : i32
    %87 = arith.cmpi ne, %86, %c0_i32_28 : i32
    scf.if %87 {
      %c0_32 = arith.constant 0 : index
      %c0_33 = arith.constant 0 : index
      %c0_34 = arith.constant 0 : index
      %92 = vector.load %arg12[%c0_32, %c0_33, %c0_34] : memref<1x32x128xf32, #tpu.memory_space<vmem>>, vector<1x32x128xf32>
      %93 = vector.shape_cast %80 : vector<32x128xf32> to vector<1x32x128xf32>
      %94 = arith.addf %92, %93 : vector<1x32x128xf32>
      %c0_35 = arith.constant 0 : index
      %c0_36 = arith.constant 0 : index
      %c0_37 = arith.constant 0 : index
      %95 = vector.load %arg12[%c0_35, %c0_36, %c0_37] : memref<1x32x128xf32, #tpu.memory_space<vmem>>, vector<1x32x128xf32>
      tpu.vector_store %arg12[%c0_35, %c0_36, %c0_37], %94 {strides = array<i32>} : memref<1x32x128xf32, #tpu.memory_space<vmem>>, vector<1x32x128xf32>,
    } else {
    }
    %c4096_i32_29 = arith.constant 4096 : i32
    %88 = arith.addi %83, %c4096_i32_29 : i32
    %c4096_i32_30 = arith.constant 4096 : i32
    %89 = arith.cmpi sgt, %88, %c4096_i32_30 : i32
    %90 = arith.extui %89 : i1 to i32
    %c0_i32_31 = arith.constant 0 : i32
    %91 = arith.cmpi ne, %90, %c0_i32_31 : i32
    scf.if %91 {
      %92 = tpu.iota {dimensions = array<i32: 0>} : vector<32x128xi32>
      %93 = tpu.iota {dimensions = array<i32: 1>} : vector<32x128xi32>
      %c128_i32 = arith.constant 128 : i32
      %94 = vector.broadcast %c128_i32 : i32 to vector<32x128xi32>
      %95 = arith.muli %92, %94 : vector<32x128xi32>
      %96 = vector.broadcast %83 : i32 to vector<32x128xi32>
      %97 = arith.addi %96, %95 : vector<32x128xi32>
      %98 = arith.addi %97, %93 : vector<32x128xi32>
      %c4096_i32_32 = arith.constant 4096 : i32
      %99 = vector.broadcast %c4096_i32_32 : i32 to vector<32x128xi32>
      %100 = arith.cmpi slt, %98, %99 : vector<32x128xi32>
      %c0_33 = arith.constant 0 : index
      %c0_34 = arith.constant 0 : index
      %c0_35 = arith.constant 0 : index
      %101 = vector.load %arg12[%c0_33, %c0_34, %c0_35] : memref<1x32x128xf32, #tpu.memory_space<vmem>>, vector<1x32x128xf32>
      %cst_36 = arith.constant 0.000000e+00 : f32
      %102 = vector.broadcast %cst_36 : f32 to vector<32x128xf32>
      %103 = arith.select %100, %80, %102 : vector<32x128xi1>, vector<32x128xf32>
      %104 = vector.shape_cast %103 : vector<32x128xf32> to vector<1x32x128xf32>
      %105 = arith.addf %101, %104 : vector<1x32x128xf32>
      %c0_37 = arith.constant 0 : index
      %c0_38 = arith.constant 0 : index
      %c0_39 = arith.constant 0 : index
      %106 = vector.load %arg12[%c0_37, %c0_38, %c0_39] : memref<1x32x128xf32, #tpu.memory_space<vmem>>, vector<1x32x128xf32>
      tpu.vector_store %arg12[%c0_37, %c0_38, %c0_39], %105 {strides = array<i32>} : memref<1x32x128xf32, #tpu.memory_space<vmem>>, vector<1x32x128xf32>,
    } else {
    }
    return
  }
  func.func @transform_0(%arg0: i32, %arg1: i32) -> (i32, i32) {
    %c1_i32 = arith.constant 1 : i32
    %0 = arith.muli %arg0, %c1_i32 : i32
    %1 = arith.addi %0, %arg1 : i32
    %c0_i32 = arith.constant 0 : i32
    %2 = arith.minsi %1, %c0_i32 : i32
    %c0_i32_0 = arith.constant 0 : i32
    %c0_i32_1 = arith.constant 0 : i32
    return %2, %c0_i32_0 : i32, i32
  }
  func.func @transform_1(%arg0: i32, %arg1: i32) -> (i32, i32) {
    %c1_i32 = arith.constant 1 : i32
    %0 = arith.muli %arg0, %c1_i32 : i32
    %1 = arith.addi %0, %arg1 : i32
    %c0_i32 = arith.constant 0 : i32
    %2 = arith.minsi %1, %c0_i32 : i32
    %c0_i32_0 = arith.constant 0 : i32
    %c0_i32_1 = arith.constant 0 : i32
    return %2, %c0_i32_0 : i32, i32
  }
  func.func @transform_2(%arg0: i32, %arg1: i32) -> (i32, i32) {
    %c1_i32 = arith.constant 1 : i32
    %0 = arith.muli %arg0, %c1_i32 : i32
    %1 = arith.addi %0, %arg1 : i32
    %c0_i32 = arith.constant 0 : i32
    %2 = arith.minsi %1, %c0_i32 : i32
    %c0_i32_0 = arith.constant 0 : i32
    %c0_i32_1 = arith.constant 0 : i32
    return %2, %c0_i32_0 : i32, i32
  }
  func.func @transform_3(%arg0: i32, %arg1: i32) -> (i32, i32) {
    %c1_i32 = arith.constant 1 : i32
    %0 = arith.muli %arg0, %c1_i32 : i32
    %1 = arith.addi %0, %arg1 : i32
    %c0_i32 = arith.constant 0 : i32
    %2 = arith.minsi %1, %c0_i32 : i32
    %c0_i32_0 = arith.constant 0 : i32
    %c0_i32_1 = arith.constant 0 : i32
    return %2, %c0_i32_0 : i32, i32
  }
  func.func @transform_4(%arg0: i32, %arg1: i32) -> (i32, i32) {
    %c1_i32 = arith.constant 1 : i32
    %0 = arith.muli %arg0, %c1_i32 : i32
    %1 = arith.addi %0, %arg1 : i32
    %c0_i32 = arith.constant 0 : i32
    %2 = arith.minsi %1, %c0_i32 : i32
    %c0_i32_0 = arith.constant 0 : i32
    %c0_i32_1 = arith.constant 0 : i32
    return %2, %c0_i32_0 : i32, i32
  }
  func.func @transform_5(%arg0: i32, %arg1: i32) -> (i32, i32) {
    %c1_i32 = arith.constant 1 : i32
    %0 = arith.muli %arg0, %c1_i32 : i32
    %1 = arith.addi %0, %arg1 : i32
    %c0_i32 = arith.constant 0 : i32
    %2 = arith.minsi %1, %c0_i32 : i32
    %c0_i32_0 = arith.constant 0 : i32
    %c0_i32_1 = arith.constant 0 : i32
    return %2, %c0_i32_0 : i32, i32
  }
  func.func @transform_6(%arg0: i32, %arg1: i32) -> (i32, i32) {
    %c1_i32 = arith.constant 1 : i32
    %0 = arith.muli %arg0, %c1_i32 : i32
    %1 = arith.addi %0, %arg1 : i32
    %c0_i32 = arith.constant 0 : i32
    %2 = arith.minsi %1, %c0_i32 : i32
    %c0_i32_0 = arith.constant 0 : i32
    %c0_i32_1 = arith.constant 0 : i32
    return %2, %c0_i32_0 : i32, i32
  }
  func.func @transform_7(%arg0: i32, %arg1: i32) -> (i32, i32) {
    %c1_i32 = arith.constant 1 : i32
    %0 = arith.muli %arg0, %c1_i32 : i32
    %1 = arith.addi %0, %arg1 : i32
    %c0_i32 = arith.constant 0 : i32
    %2 = arith.minsi %1, %c0_i32 : i32
    %c0_i32_0 = arith.constant 0 : i32
    %c0_i32_1 = arith.constant 0 : i32
    return %2, %c0_i32_0 : i32, i32
  }
  func.func @transform_8(%arg0: i32, %arg1: i32) -> (i32, i32) {
    %c1_i32 = arith.constant 1 : i32
    %0 = arith.muli %arg0, %c1_i32 : i32
    %1 = arith.addi %0, %arg1 : i32
    %c0_i32 = arith.constant 0 : i32
    %2 = arith.minsi %1, %c0_i32 : i32
    %c0_i32_0 = arith.constant 0 : i32
    %c0_i32_1 = arith.constant 0 : i32
    return %2, %c0_i32_0 : i32, i32
  }
  func.func @transform_9(%arg0: i32, %arg1: i32) -> (i32, i32) {
    %c1_i32 = arith.constant 1 : i32
    %0 = arith.muli %arg0, %c1_i32 : i32
    %1 = arith.addi %0, %arg1 : i32
    %c0_i32 = arith.constant 0 : i32
    %2 = arith.minsi %1, %c0_i32 : i32
    %c0_i32_0 = arith.constant 0 : i32
    %c0_i32_1 = arith.constant 0 : i32
    return %2, %c0_i32_0 : i32, i32
  }
  func.func @transform_10(%arg0: i32, %arg1: i32) -> (i32, i32, i32) {
    %c0_i32 = arith.constant 0 : i32
    %c0_i32_0 = arith.constant 0 : i32
    %c0_i32_1 = arith.constant 0 : i32
    return %arg0, %c0_i32, %c0_i32_0 : i32, i32, i32
  }
}

</mosaic_0001>

<llo_original>
// kernel: tpu_custom_call.1
$region0: #{tpu_custom_call.1}
  #allocation0 [shape = 'u32[]', space=smem, size = 0x4, offset = 0x4, fixed_abs, tag = 'smem constant byte address 0x4 - core index']
  #allocation1 [shape = 'u32[144,128]{1,0:T(1,128)}', space=vmem, size = 0x12000, scoped, tag = 'internal scratch']
  %s0 = inlined_call_operand.hbm [shape: f32[32,128], index: 0, kind: input, shape index: {}]
  %s1 = inlined_call_operand.hbm [shape: f32[32,128], index: 1, kind: input, shape index: {}]
  %s2 = inlined_call_operand.hbm [shape: f32[32,128], index: 2, kind: input, shape index: {}]
  %s3 = inlined_call_operand.hbm [shape: f32[32,128], index: 3, kind: input, shape index: {}]
  %s4 = inlined_call_operand.hbm [shape: f32[32,128], index: 4, kind: input, shape index: {}]
  %s5 = inlined_call_operand.hbm [shape: f32[32,128], index: 5, kind: input, shape index: {}]
  %s6 = inlined_call_operand.hbm [shape: f32[32,128], index: 6, kind: input, shape index: {}]
  %s7 = inlined_call_operand.hbm [shape: f32[32,128], index: 7, kind: input, shape index: {}]
  %s8 = inlined_call_operand.hbm [shape: f32[32,128], index: 8, kind: input, shape index: {}]
  %s9 = inlined_call_operand.vmem [shape: f32[32,128], index: 9, kind: input, shape index: {}]
  %s10 = inlined_call_operand.hbm [shape: f32[1,32,128], index: 10, kind: output, shape index: {}]
  %s11 = sld [smem:[#allocation0]]
  $region98: #{tpu_custom_call.1} parent=0
    _
  %s13 = ssub.s32 1, %s11
  %s14 = scalar_select 0, %s13, %s11
  $region1: #{tpu_custom_call.1} parent=0
    #allocation2 [shape = 'u8[16384]{0}', space=vmem, size = 0x4000, scoped, tag = 'input window, operand 0, single buffered']
    #allocation3 [shape = 's32[1]{0}', space=sflag, size = 0x4, scoped, tag = 'scoped memory for tpu_custom_call.1']
    #allocation4 [shape = 's32[1]{0}', space=sflag, size = 0x4, scoped, tag = 'scoped memory for tpu_custom_call.1']
    #allocation5 [shape = 'u8[16384]{0}', space=vmem, size = 0x4000, scoped, tag = 'input window, operand 1, single buffered']
    #allocation6 [shape = 's32[1]{0}', space=sflag, size = 0x4, scoped, tag = 'scoped memory for tpu_custom_call.1']
    #allocation7 [shape = 'u8[16384]{0}', space=vmem, size = 0x4000, scoped, tag = 'input window, operand 2, single buffered']
    #allocation8 [shape = 'u8[16384]{0}', space=vmem, size = 0x4000, scoped, tag = 'input window, operand 3, single buffered']
    #allocation9 [shape = 's32[1]{0}', space=sflag, size = 0x4, scoped, tag = 'scoped memory for tpu_custom_call.1']
    #allocation10 [shape = 'u8[16384]{0}', space=vmem, size = 0x4000, scoped, tag = 'input window, operand 4, single buffered']
    #allocation11 [shape = 'u8[16384]{0}', space=vmem, size = 0x4000, scoped, tag = 'input window, operand 5, single buffered']
    #allocation12 [shape = 's32[1]{0}', space=sflag, size = 0x4, scoped, tag = 'scoped memory for tpu_custom_call.1']
    #allocation13 [shape = 'u8[16384]{0}', space=vmem, size = 0x4000, scoped, tag = 'input window, operand 6, single buffered']
    #allocation14 [shape = 'u8[16384]{0}', space=vmem, size = 0x4000, scoped, tag = 'input window, operand 7, single buffered']
    #allocation15 [shape = 's32[1]{0}', space=sflag, size = 0x4, scoped, tag = 'scoped memory for tpu_custom_call.1']
    #allocation16 [shape = 'u8[16384]{0}', space=vmem, size = 0x4000, scoped, tag = 'input window, operand 8, single buffered']
    #allocation17 [shape = 'u8[16384]{0}', space=vmem, size = 0x4000, scoped, tag = 'output window, operand 0, single buffered']
    %15 = vsyncpa [#allocation3], 0
    %16 = vsyncpa [#allocation6], 0
    %17 = vsyncpa [#allocation9], 0
    %18 = vsyncpa [#allocation12], 0
    %19 = vsyncpa [#allocation15], 0
    %20 = vsyncpa [#allocation4], 0
    // Predicated region
    $region2: #{tpu_custom_call.1} parent=1 // pred_check
      _
    $region3: #{tpu_custom_call.1} parent=1 // pred_check_branch
      %22 = sbr.rel (0) target = $region5
    $region4: #{tpu_custom_call.1} parent=1 // pred_region
      %s23 = sadd.s32 0, 0
      %p24 = scmp.lt.s32.totalorder %s23, 0
      %s25 = scalar_select %p24, %s23, 0
      %s26 = smul.u32 4, %s25
      %s28 = ssub.s32 512, 512
      %29 = vsyncadd [#allocation3], %s28
      %s30 = smul.addr %s26, 128
      %s31 = scalar_lea.hbm %s0, %s30
      %s32 = sshll.u32 [#allocation2], 4
      %s33 = int_to_ptr.vmem [resolvable:$true] %s32
      %38 = dma.hbm_to_vmem [thread:$0]  %s31, 512, %s33, [#allocation3], 128, 128, 8
    $region5: #{tpu_custom_call.1} parent=1 // pred_fallthru
      _
    // Predicated region
    $region6: #{tpu_custom_call.1} parent=1 // pred_check
      _
    $region7: #{tpu_custom_call.1} parent=1 // pred_check_branch
      %40 = sbr.rel (0) target = $region9
    $region8: #{tpu_custom_call.1} parent=1 // pred_region
      %s41 = sadd.s32 0, 0
      %p42 = scmp.lt.s32.totalorder %s41, 0
      %s43 = scalar_select %p42, %s41, 0
      %s44 = smul.u32 4, %s43
      %s46 = ssub.s32 512, 512
      %47 = vsyncadd [#allocation6], %s46
      %s48 = smul.addr %s44, 128
      %s49 = scalar_lea.hbm %s1, %s48
      %s50 = sshll.u32 [#allocation5], 4
      %s51 = int_to_ptr.vmem [resolvable:$true] %s50
      %56 = dma.hbm_to_vmem [thread:$0]  %s49, 512, %s51, [#allocation6], 128, 128, 8
    $region9: #{tpu_custom_call.1} parent=1 // pred_fallthru
      _
    // Predicated region
    $region10: #{tpu_custom_call.1} parent=1 // pred_check
      _
    $region11: #{tpu_custom_call.1} parent=1 // pred_check_branch
      %58 = sbr.rel (0) target = $region13
    $region12: #{tpu_custom_call.1} parent=1 // pred_region
      %s59 = sadd.s32 0, 0
      %p60 = scmp.lt.s32.totalorder %s59, 0
      %s61 = scalar_select %p60, %s59, 0
      %s62 = smul.u32 4, %s61
      %s64 = ssub.s32 512, 512
      %65 = vsyncadd [#allocation6], %s64
      %s66 = smul.addr %s62, 128
      %s67 = scalar_lea.hbm %s2, %s66
      %s68 = sshll.u32 [#allocation7], 4
      %s69 = int_to_ptr.vmem [resolvable:$true] %s68
      %74 = dma.hbm_to_vmem [thread:$0]  %s67, 512, %s69, [#allocation6], 128, 128, 8
    $region13: #{tpu_custom_call.1} parent=1 // pred_fallthru
      _
    // Predicated region
    $region14: #{tpu_custom_call.1} parent=1 // pred_check
      _
    $region15: #{tpu_custom_call.1} parent=1 // pred_check_branch
      %76 = sbr.rel (0) target = $region17
    $region16: #{tpu_custom_call.1} parent=1 // pred_region
      %s77 = sadd.s32 0, 0
      %p78 = scmp.lt.s32.totalorder %s77, 0
      %s79 = scalar_select %p78, %s77, 0
      %s80 = smul.u32 4, %s79
      %s82 = ssub.s32 512, 512
      %83 = vsyncadd [#allocation9], %s82
      %s84 = smul.addr %s80, 128
      %s85 = scalar_lea.hbm %s3, %s84
      %s86 = sshll.u32 [#allocation8], 4
      %s87 = int_to_ptr.vmem [resolvable:$true] %s86
      %92 = dma.hbm_to_vmem [thread:$0]  %s85, 512, %s87, [#allocation9], 128, 128, 8
    $region17: #{tpu_custom_call.1} parent=1 // pred_fallthru
      _
    // Predicated region
    $region18: #{tpu_custom_call.1} parent=1 // pred_check
      _
    $region19: #{tpu_custom_call.1} parent=1 // pred_check_branch
      %94 = sbr.rel (0) target = $region21
    $region20: #{tpu_custom_call.1} parent=1 // pred_region
      %s95 = sadd.s32 0, 0
      %p96 = scmp.lt.s32.totalorder %s95, 0
      %s97 = scalar_select %p96, %s95, 0
      %s98 = smul.u32 4, %s97
      %s100 = ssub.s32 512, 512
      %101 = vsyncadd [#allocation9], %s100
      %s102 = smul.addr %s98, 128
      %s103 = scalar_lea.hbm %s4, %s102
      %s104 = sshll.u32 [#allocation10], 4
      %s105 = int_to_ptr.vmem [resolvable:$true] %s104
      %110 = dma.hbm_to_vmem [thread:$0]  %s103, 512, %s105, [#allocation9], 128, 128, 8
    $region21: #{tpu_custom_call.1} parent=1 // pred_fallthru
      _
    // Predicated region
    $region22: #{tpu_custom_call.1} parent=1 // pred_check
      _
    $region23: #{tpu_custom_call.1} parent=1 // pred_check_branch
      %112 = sbr.rel (0) target = $region25
    $region24: #{tpu_custom_call.1} parent=1 // pred_region
      %s113 = sadd.s32 0, 0
      %p114 = scmp.lt.s32.totalorder %s113, 0
      %s115 = scalar_select %p114, %s113, 0
      %s116 = smul.u32 4, %s115
      %s118 = ssub.s32 512, 512
      %119 = vsyncadd [#allocation12], %s118
      %s120 = smul.addr %s116, 128
      %s121 = scalar_lea.hbm %s5, %s120
      %s122 = sshll.u32 [#allocation11], 4
      %s123 = int_to_ptr.vmem [resolvable:$true] %s122
      %128 = dma.hbm_to_vmem [thread:$0]  %s121, 512, %s123, [#allocation12], 128, 128, 8
    $region25: #{tpu_custom_call.1} parent=1 // pred_fallthru
      _
    // Predicated region
    $region26: #{tpu_custom_call.1} parent=1 // pred_check
      _
    $region27: #{tpu_custom_call.1} parent=1 // pred_check_branch
      %130 = sbr.rel (0) target = $region29
    $region28: #{tpu_custom_call.1} parent=1 // pred_region
      %s131 = sadd.s32 0, 0
      %p132 = scmp.lt.s32.totalorder %s131, 0
      %s133 = scalar_select %p132, %s131, 0
      %s134 = smul.u32 4, %s133
      %s136 = ssub.s32 512, 512
      %137 = vsyncadd [#allocation12], %s136
      %s138 = smul.addr %s134, 128
      %s139 = scalar_lea.hbm %s6, %s138
      %s140 = sshll.u32 [#allocation13], 4
      %s141 = int_to_ptr.vmem [resolvable:$true] %s140
      %146 = dma.hbm_to_vmem [thread:$0]  %s139, 512, %s141, [#allocation12], 128, 128, 8
    $region29: #{tpu_custom_call.1} parent=1 // pred_fallthru
      _
    // Predicated region
    $region30: #{tpu_custom_call.1} parent=1 // pred_check
      _
    $region31: #{tpu_custom_call.1} parent=1 // pred_check_branch
      %148 = sbr.rel (0) target = $region33
    $region32: #{tpu_custom_call.1} parent=1 // pred_region
      %s149 = sadd.s32 0, 0
      %p150 = scmp.lt.s32.totalorder %s149, 0
      %s151 = scalar_select %p150, %s149, 0
      %s152 = smul.u32 4, %s151
      %s154 = ssub.s32 512, 512
      %155 = vsyncadd [#allocation15], %s154
      %s156 = smul.addr %s152, 128
      %s157 = scalar_lea.hbm %s7, %s156
      %s158 = sshll.u32 [#allocation14], 4
      %s159 = int_to_ptr.vmem [resolvable:$true] %s158
      %164 = dma.hbm_to_vmem [thread:$0]  %s157, 512, %s159, [#allocation15], 128, 128, 8
    $region33: #{tpu_custom_call.1} parent=1 // pred_fallthru
      _
    // Predicated region
    $region34: #{tpu_custom_call.1} parent=1 // pred_check
      _
    $region35: #{tpu_custom_call.1} parent=1 // pred_check_branch
      %166 = sbr.rel (0) target = $region37
    $region36: #{tpu_custom_call.1} parent=1 // pred_region
      %s167 = sadd.s32 0, 0
      %p168 = scmp.lt.s32.totalorder %s167, 0
      %s169 = scalar_select %p168, %s167, 0
      %s170 = smul.u32 4, %s169
      %s172 = ssub.s32 512, 512
      %173 = vsyncadd [#allocation15], %s172
      %s174 = smul.addr %s170, 128
      %s175 = scalar_lea.hbm %s8, %s174
      %s176 = sshll.u32 [#allocation16], 4
      %s177 = int_to_ptr.vmem [resolvable:$true] %s176
      %182 = dma.hbm_to_vmem [thread:$0]  %s175, 512, %s177, [#allocation15], 128, 128, 8
    $region37: #{tpu_custom_call.1} parent=1 // pred_fallthru
      _
    // Predicated region
    $region38: #{tpu_custom_call.1} parent=1 // pred_check
      _
    $region39: #{tpu_custom_call.1} parent=1 // pred_check_branch
      %184 = sbr.rel (0) target = $region41
    $region40: #{tpu_custom_call.1} parent=1 // pred_region
      %s185 = sadd.s32 0, 0
      %p186 = scmp.lt.s32.totalorder %s185, 0
      %s187 = scalar_select %p186, %s185, 0
      %s188 = smul.u32 4, %s187
      %p189 = scmp.lt.s32.totalorder %s188, 3
      %s190 = scalar_select %p189, %s188, 3
      %s191 = smul.addr %s190, 8
      %s192 = scalar_lea.vmem %s9, %s191
      %s193 = sadd.s32 0, 0
      %p194 = scmp.lt.s32.totalorder %s193, 0
      %s195 = scalar_select %p194, %s193, 0
      %s196 = smul.u32 4, %s195
    $region41: #{tpu_custom_call.1} parent=1 // pred_fallthru
      _
    // Predicated region
    $region42: #{tpu_custom_call.1} parent=1 // pred_check
      _
    $region43: #{tpu_custom_call.1} parent=1 // pred_check_branch
      %198 = sbr.rel (0) target = $region45
    $region44: #{tpu_custom_call.1} parent=1 // pred_region
      %199 = dma.done [#allocation3], 512
    $region45: #{tpu_custom_call.1} parent=1 // pred_fallthru
      _
    // Predicated region
    $region46: #{tpu_custom_call.1} parent=1 // pred_check
      _
    $region47: #{tpu_custom_call.1} parent=1 // pred_check_branch
      %201 = sbr.rel (0) target = $region49
    $region48: #{tpu_custom_call.1} parent=1 // pred_region
      %202 = dma.done [#allocation6], 512
    $region49: #{tpu_custom_call.1} parent=1 // pred_fallthru
      _
    // Predicated region
    $region50: #{tpu_custom_call.1} parent=1 // pred_check
      _
    $region51: #{tpu_custom_call.1} parent=1 // pred_check_branch
      %204 = sbr.rel (0) target = $region53
    $region52: #{tpu_custom_call.1} parent=1 // pred_region
      %205 = dma.done [#allocation6], 512
    $region53: #{tpu_custom_call.1} parent=1 // pred_fallthru
      _
    // Predicated region
    $region54: #{tpu_custom_call.1} parent=1 // pred_check
      _
    $region55: #{tpu_custom_call.1} parent=1 // pred_check_branch
      %207 = sbr.rel (0) target = $region57
    $region56: #{tpu_custom_call.1} parent=1 // pred_region
      %208 = dma.done [#allocation9], 512
    $region57: #{tpu_custom_call.1} parent=1 // pred_fallthru
      _
    // Predicated region
    $region58: #{tpu_custom_call.1} parent=1 // pred_check
      _
    $region59: #{tpu_custom_call.1} parent=1 // pred_check_branch
      %210 = sbr.rel (0) target = $region61
    $region60: #{tpu_custom_call.1} parent=1 // pred_region
      %211 = dma.done [#allocation9], 512
    $region61: #{tpu_custom_call.1} parent=1 // pred_fallthru
      _
    // Predicated region
    $region62: #{tpu_custom_call.1} parent=1 // pred_check
      _
    $region63: #{tpu_custom_call.1} parent=1 // pred_check_branch
      %213 = sbr.rel (0) target = $region65
    $region64: #{tpu_custom_call.1} parent=1 // pred_region
      %214 = dma.done [#allocation12], 512
    $region65: #{tpu_custom_call.1} parent=1 // pred_fallthru
      _
    // Predicated region
    $region66: #{tpu_custom_call.1} parent=1 // pred_check
      _
    $region67: #{tpu_custom_call.1} parent=1 // pred_check_branch
      %216 = sbr.rel (0) target = $region69
    $region68: #{tpu_custom_call.1} parent=1 // pred_region
      %217 = dma.done [#allocation12], 512
    $region69: #{tpu_custom_call.1} parent=1 // pred_fallthru
      _
    // Predicated region
    $region70: #{tpu_custom_call.1} parent=1 // pred_check
      _
    $region71: #{tpu_custom_call.1} parent=1 // pred_check_branch
      %219 = sbr.rel (0) target = $region73
    $region72: #{tpu_custom_call.1} parent=1 // pred_region
      %220 = dma.done [#allocation15], 512
    $region73: #{tpu_custom_call.1} parent=1 // pred_fallthru
      _
    // Predicated region
    $region74: #{tpu_custom_call.1} parent=1 // pred_check
      _
    $region75: #{tpu_custom_call.1} parent=1 // pred_check_branch
      %222 = sbr.rel (0) target = $region77
    $region76: #{tpu_custom_call.1} parent=1 // pred_region
      %223 = dma.done [#allocation15], 512
    $region77: #{tpu_custom_call.1} parent=1 // pred_fallthru
      _
    %s224 = sadd.s32 0, 0
    %p225 = scmp.lt.s32.totalorder %s224, 0
    %s226 = scalar_select %p225, %s224, 0
    %s227 = smul.u32 4, %s226
    %p228 = scmp.lt.s32.totalorder %s227, 3
    %s229 = scalar_select %p228, %s227, 3
    %s230 = smul.addr %s229, 8
    %s231 = scalar_lea.vmem %s9, %s230
    %s232 = sadd.s32 0, 0
    %p233 = scmp.lt.s32.totalorder %s232, 0
    %s234 = scalar_select %p233, %s232, 0
    %s235 = smul.u32 4, %s234
    %s236 = sadd.s32 0, 0
    %p237 = scmp.lt.s32.totalorder %s236, 0
    %s238 = scalar_select %p237, %s236, 0
    %s239 = smul.u32 4, %s238
    %s240 = sadd.s32 0, 0
    %p241 = scmp.lt.s32.totalorder %s240, 0
    %s242 = scalar_select %p241, %s240, 0
    %s243 = smul.u32 4, %s242
    %s244 = sadd.s32 0, 0
    %p245 = scmp.lt.s32.totalorder %s244, 0
    %s246 = scalar_select %p245, %s244, 0
    %s247 = smul.u32 4, %s246
    %s248 = sadd.s32 0, 0
    %p249 = scmp.lt.s32.totalorder %s248, 0
    %s250 = scalar_select %p249, %s248, 0
    %s251 = smul.u32 4, %s250
    %s252 = sadd.s32 0, 0
    %p253 = scmp.lt.s32.totalorder %s252, 0
    %s254 = scalar_select %p253, %s252, 0
    %s255 = smul.u32 4, %s254
    %s256 = sadd.s32 0, 0
    %p257 = scmp.lt.s32.totalorder %s256, 0
    %s258 = scalar_select %p257, %s256, 0
    %s259 = smul.u32 4, %s258
    %s260 = sadd.s32 0, 0
    %p261 = scmp.lt.s32.totalorder %s260, 0
    %s262 = scalar_select %p261, %s260, 0
    %s263 = smul.u32 4, %s262
    %s264 = sadd.s32 0, 0
    %p265 = scmp.lt.s32.totalorder %s264, 0
    %s266 = scalar_select %p265, %s264, 0
    %s267 = smul.u32 4, %s266
    %s268 = sadd.s32 0, 0
    %p269 = scmp.lt.s32.totalorder %s268, 0
    %s270 = scalar_select %p269, %s268, 0
    %s271 = smul.u32 4, %s270
    %p272 = scmp.lt.s32.totalorder %s271, 3
    %s273 = scalar_select %p272, %s271, 3
    %s274 = smul.addr %s273, 8
    %s275 = scalar_lea.vmem %s9, %s274
    %s276 = sadd.s32 0, 0
    %p277 = scmp.lt.s32.totalorder %s276, 0
    %s278 = scalar_select %p277, %s276, 0
    %s279 = smul.u32 4, %s278
    %p280 = scmp.eq.s32.totalorder 0, 0
    // Predicated region
    $region78: #{tpu_custom_call.1} parent=1 // pred_check
      %p281 = pneg %p280
    $region79: #{tpu_custom_call.1} parent=1 // pred_check_branch
      %283 = sbr.rel (%p281) target = $region81
    $region80: #{tpu_custom_call.1} parent=1 // pred_region
      %284 = vst [vmem:[#allocation17] sm:$0xff] 0.0
      %285 = vst [vmem:[#allocation17 + $0x8] sm:$0xff] 0.0
      %286 = vst [vmem:[#allocation17 + $0x10] sm:$0xff] 0.0
      %287 = vst [vmem:[#allocation17 + $0x18] sm:$0xff] 0.0
    $region81: #{tpu_custom_call.1} parent=1 // pred_fallthru
      _
    %v288 = vld [vmem:[#allocation2] sm:$0xff]
    %v289 = vld [vmem:[#allocation2 + $0x8] sm:$0xff]
    %v290 = vld [vmem:[#allocation2 + $0x10] sm:$0xff]
    %v291 = vld [vmem:[#allocation2 + $0x18] sm:$0xff]
    %v292 = vld [vmem:[#allocation5] sm:$0xff]
    %v293 = vld [vmem:[#allocation5 + $0x8] sm:$0xff]
    %v294 = vld [vmem:[#allocation5 + $0x10] sm:$0xff]
    %v295 = vld [vmem:[#allocation5 + $0x18] sm:$0xff]
    %v296 = vld [vmem:[#allocation7] sm:$0xff]
    %v297 = vld [vmem:[#allocation7 + $0x8] sm:$0xff]
    %v298 = vld [vmem:[#allocation7 + $0x10] sm:$0xff]
    %v299 = vld [vmem:[#allocation7 + $0x18] sm:$0xff]
    %v300 = vld [vmem:[#allocation8] sm:$0xff]
    %v301 = vld [vmem:[#allocation8 + $0x8] sm:$0xff]
    %v302 = vld [vmem:[#allocation8 + $0x10] sm:$0xff]
    %v303 = vld [vmem:[#allocation8 + $0x18] sm:$0xff]
    %v304 = vld [vmem:[#allocation10] sm:$0xff]
    %v305 = vld [vmem:[#allocation10 + $0x8] sm:$0xff]
    %v306 = vld [vmem:[#allocation10 + $0x10] sm:$0xff]
    %v307 = vld [vmem:[#allocation10 + $0x18] sm:$0xff]
    %v308 = vld [vmem:[#allocation11] sm:$0xff]
    %v309 = vld [vmem:[#allocation11 + $0x8] sm:$0xff]
    %v310 = vld [vmem:[#allocation11 + $0x10] sm:$0xff]
    %v311 = vld [vmem:[#allocation11 + $0x18] sm:$0xff]
    %v312 = vld [vmem:[#allocation13] sm:$0xff]
    %v313 = vld [vmem:[#allocation13 + $0x8] sm:$0xff]
    %v314 = vld [vmem:[#allocation13 + $0x10] sm:$0xff]
    %v315 = vld [vmem:[#allocation13 + $0x18] sm:$0xff]
    %v316 = vld [vmem:[#allocation14] sm:$0xff]
    %v317 = vld [vmem:[#allocation14 + $0x8] sm:$0xff]
    %v318 = vld [vmem:[#allocation14 + $0x10] sm:$0xff]
    %v319 = vld [vmem:[#allocation14 + $0x18] sm:$0xff]
    %v320 = vld [vmem:[#allocation16] sm:$0xff]
    %v321 = vld [vmem:[#allocation16 + $0x8] sm:$0xff]
    %v322 = vld [vmem:[#allocation16 + $0x10] sm:$0xff]
    %v323 = vld [vmem:[#allocation16 + $0x18] sm:$0xff]
    %v324 = vld [vmem:[%s275] sm:$0xff]
    %v325 = vld [vmem:[%s275 + $0x8] sm:$0xff]
    %v326 = vld [vmem:[%s275 + $0x10] sm:$0xff]
    %v327 = vld [vmem:[%s275 + $0x18] sm:$0xff]
    %v328 = vmul.f32 %v288, %v300
    %v329 = vmul.f32 %v289, %v301
    %v330 = vmul.f32 %v290, %v302
    %v331 = vmul.f32 %v291, %v303
    %v332 = vmul.f32 %v292, %v296
    %v333 = vmul.f32 %v293, %v297
    %v334 = vmul.f32 %v294, %v298
    %v335 = vmul.f32 %v295, %v299
    %v336 = vsub.f32 %v328, %v332
    %v337 = vsub.f32 %v329, %v333
    %v338 = vsub.f32 %v330, %v334
    %v339 = vsub.f32 %v331, %v335
    %v340 = vmul.f32 %v304, %v300
    %v341 = vmul.f32 %v305, %v301
    %v342 = vmul.f32 %v306, %v302
    %v343 = vmul.f32 %v307, %v303
    %v344 = vmul.f32 %v308, %v296
    %v345 = vmul.f32 %v309, %v297
    %v346 = vmul.f32 %v310, %v298
    %v347 = vmul.f32 %v311, %v299
    %v348 = vsub.f32 %v340, %v344
    %v349 = vsub.f32 %v341, %v345
    %v350 = vsub.f32 %v342, %v346
    %v351 = vsub.f32 %v343, %v347
    %v352 = vmul.f32 %v308, %v288
    %v353 = vmul.f32 %v309, %v289
    %v354 = vmul.f32 %v310, %v290
    %v355 = vmul.f32 %v311, %v291
    %v356 = vmul.f32 %v304, %v292
    %v357 = vmul.f32 %v305, %v293
    %v358 = vmul.f32 %v306, %v294
    %v359 = vmul.f32 %v307, %v295
    %v360 = vsub.f32 %v352, %v356
    %v361 = vsub.f32 %v353, %v357
    %v362 = vsub.f32 %v354, %v358
    %v363 = vsub.f32 %v355, %v359
    %v364 = vmul.f32 %v312, %v300
    %v365 = vmul.f32 %v313, %v301
    %v366 = vmul.f32 %v314, %v302
    %v367 = vmul.f32 %v315, %v303
    %v368 = vmul.f32 %v316, %v296
    %v369 = vmul.f32 %v317, %v297
    %v370 = vmul.f32 %v318, %v298
    %v371 = vmul.f32 %v319, %v299
    %v372 = vsub.f32 %v364, %v368
    %v373 = vsub.f32 %v365, %v369
    %v374 = vsub.f32 %v366, %v370
    %v375 = vsub.f32 %v367, %v371
    %v376 = vmul.f32 %v316, %v288
    %v377 = vmul.f32 %v317, %v289
    %v378 = vmul.f32 %v318, %v290
    %v379 = vmul.f32 %v319, %v291
    %v380 = vmul.f32 %v312, %v292
    %v381 = vmul.f32 %v313, %v293
    %v382 = vmul.f32 %v314, %v294
    %v383 = vmul.f32 %v315, %v295
    %v384 = vsub.f32 %v376, %v380
    %v385 = vsub.f32 %v377, %v381
    %v386 = vsub.f32 %v378, %v382
    %v387 = vsub.f32 %v379, %v383
    %v388 = vmul.f32 %v320, %v300
    %v389 = vmul.f32 %v321, %v301
    %v390 = vmul.f32 %v322, %v302
    %v391 = vmul.f32 %v323, %v303
    %v392 = vmul.f32 %v324, %v296
    %v393 = vmul.f32 %v325, %v297
    %v394 = vmul.f32 %v326, %v298
    %v395 = vmul.f32 %v327, %v299
    %v396 = vsub.f32 %v388, %v392
    %v397 = vsub.f32 %v389, %v393
    %v398 = vsub.f32 %v390, %v394
    %v399 = vsub.f32 %v391, %v395
    %v400 = vmul.f32 %v324, %v288
    %v401 = vmul.f32 %v325, %v289
    %v402 = vmul.f32 %v326, %v290
    %v403 = vmul.f32 %v327, %v291
    %v404 = vmul.f32 %v320, %v292
    %v405 = vmul.f32 %v321, %v293
    %v406 = vmul.f32 %v322, %v294
    %v407 = vmul.f32 %v323, %v295
    %v408 = vsub.f32 %v400, %v404
    %v409 = vsub.f32 %v401, %v405
    %v410 = vsub.f32 %v402, %v406
    %v411 = vsub.f32 %v403, %v407
    %v412 = vmul.f32 %v348, %v348
    %v413 = vmul.f32 %v349, %v349
    %v414 = vmul.f32 %v350, %v350
    %v415 = vmul.f32 %v351, %v351
    %v416 = vmul.f32 %v372, %v372
    %v417 = vmul.f32 %v373, %v373
    %v418 = vmul.f32 %v374, %v374
    %v419 = vmul.f32 %v375, %v375
    %v420 = vadd.f32 %v412, %v416
    %v421 = vadd.f32 %v413, %v417
    %v422 = vadd.f32 %v414, %v418
    %v423 = vadd.f32 %v415, %v419
    %v424 = vmul.f32 %v396, %v396
    %v425 = vmul.f32 %v397, %v397
    %v426 = vmul.f32 %v398, %v398
    %v427 = vmul.f32 %v399, %v399
    %v428 = vadd.f32 %v420, %v424
    %v429 = vadd.f32 %v421, %v425
    %v430 = vadd.f32 %v422, %v426
    %v431 = vadd.f32 %v423, %v427
    %v432 = vmul.f32 %v360, %v360
    %v433 = vmul.f32 %v361, %v361
    %v434 = vmul.f32 %v362, %v362
    %v435 = vmul.f32 %v363, %v363
    %v436 = vmul.f32 %v384, %v384
    %v437 = vmul.f32 %v385, %v385
    %v438 = vmul.f32 %v386, %v386
    %v439 = vmul.f32 %v387, %v387
    %v440 = vadd.f32 %v432, %v436
    %v441 = vadd.f32 %v433, %v437
    %v442 = vadd.f32 %v434, %v438
    %v443 = vadd.f32 %v435, %v439
    %v444 = vmul.f32 %v408, %v408
    %v445 = vmul.f32 %v409, %v409
    %v446 = vmul.f32 %v410, %v410
    %v447 = vmul.f32 %v411, %v411
    %v448 = vadd.f32 %v440, %v444
    %v449 = vadd.f32 %v441, %v445
    %v450 = vadd.f32 %v442, %v446
    %v451 = vadd.f32 %v443, %v447
    %v452 = vmul.f32 %v348, %v360
    %v453 = vmul.f32 %v349, %v361
    %v454 = vmul.f32 %v350, %v362
    %v455 = vmul.f32 %v351, %v363
    %v456 = vmul.f32 %v372, %v384
    %v457 = vmul.f32 %v373, %v385
    %v458 = vmul.f32 %v374, %v386
    %v459 = vmul.f32 %v375, %v387
    %v460 = vadd.f32 %v452, %v456
    %v461 = vadd.f32 %v453, %v457
    %v462 = vadd.f32 %v454, %v458
    %v463 = vadd.f32 %v455, %v459
    %v464 = vmul.f32 %v396, %v408
    %v465 = vmul.f32 %v397, %v409
    %v466 = vmul.f32 %v398, %v410
    %v467 = vmul.f32 %v399, %v411
    %v468 = vadd.f32 %v460, %v464
    %v469 = vadd.f32 %v461, %v465
    %v470 = vadd.f32 %v462, %v466
    %v471 = vadd.f32 %v463, %v467
    %v472 = vadd.f32 %v428, %v448
    %v473 = vadd.f32 %v429, %v449
    %v474 = vadd.f32 %v430, %v450
    %v475 = vadd.f32 %v431, %v451
    %v476 = vmul.f32 %v428, %v448
    %v477 = vmul.f32 %v429, %v449
    %v478 = vmul.f32 %v430, %v450
    %v479 = vmul.f32 %v431, %v451
    %v480 = vmul.f32 %v468, %v468
    %v481 = vmul.f32 %v469, %v469
    %v482 = vmul.f32 %v470, %v470
    %v483 = vmul.f32 %v471, %v471
    %v484 = vsub.f32 %v476, %v480
    %v485 = vsub.f32 %v477, %v481
    %v486 = vsub.f32 %v478, %v482
    %v487 = vsub.f32 %v479, %v483
    %v488 = vmul.f32 %v336, %v336
    %v489 = vmul.f32 %v337, %v337
    %v490 = vmul.f32 %v338, %v338
    %v491 = vmul.f32 %v339, %v339
    %v492 = vrcp.pop %v488
    %v493 = vrcp.pop %v489
    %v494 = vrcp.pop %v490
    %v495 = vrcp.pop %v491
    %vm496 = vcmp.eq.f32.partialorder %v488, 0.0
    %vm497 = vcmp.eq.f32.partialorder %v489, 0.0
    %vm498 = vcmp.eq.f32.partialorder %v490, 0.0
    %vm499 = vcmp.eq.f32.partialorder %v491, 0.0
    %v500 = vmul.f32 %v488, %v492
    %v501 = vmul.f32 %v489, %v493
    %v502 = vmul.f32 %v490, %v494
    %v503 = vmul.f32 %v491, %v495
    %v504 = vsub.f32 2.0, %v500
    %v505 = vsub.f32 2.0, %v501
    %v506 = vsub.f32 2.0, %v502
    %v507 = vsub.f32 2.0, %v503
    %v508 = vmul.f32 %v492, %v504
    %v509 = vmul.f32 %v493, %v505
    %v510 = vmul.f32 %v494, %v506
    %v511 = vmul.f32 %v495, %v507
    %v512 = vsel %vm496, %v492, %v508
    %v513 = vsel %vm497, %v493, %v509
    %v514 = vsel %vm498, %v494, %v510
    %v515 = vsel %vm499, %v495, %v511
    %v516 = vrcp.pop %v484
    %v517 = vrcp.pop %v485
    %v518 = vrcp.pop %v486
    %v519 = vrcp.pop %v487
    %vm520 = vcmp.eq.f32.partialorder %v484, 0.0
    %vm521 = vcmp.eq.f32.partialorder %v485, 0.0
    %vm522 = vcmp.eq.f32.partialorder %v486, 0.0
    %vm523 = vcmp.eq.f32.partialorder %v487, 0.0
    %v524 = vmul.f32 %v484, %v516
    %v525 = vmul.f32 %v485, %v517
    %v526 = vmul.f32 %v486, %v518
    %v527 = vmul.f32 %v487, %v519
    %v528 = vsub.f32 2.0, %v524
    %v529 = vsub.f32 2.0, %v525
    %v530 = vsub.f32 2.0, %v526
    %v531 = vsub.f32 2.0, %v527
    %v532 = vmul.f32 %v516, %v528
    %v533 = vmul.f32 %v517, %v529
    %v534 = vmul.f32 %v518, %v530
    %v535 = vmul.f32 %v519, %v531
    %v536 = vsel %vm520, %v516, %v532
    %v537 = vsel %vm521, %v517, %v533
    %v538 = vsel %vm522, %v518, %v534
    %v539 = vsel %vm523, %v519, %v535
    %v540 = vmul.f32 %v472, %v512
    %v541 = vmul.f32 %v473, %v513
    %v542 = vmul.f32 %v474, %v514
    %v543 = vmul.f32 %v475, %v515
    %v544 = vmul.f32 %v472, %v488
    %v545 = vmul.f32 %v473, %v489
    %v546 = vmul.f32 %v474, %v490
    %v547 = vmul.f32 %v475, %v491
    %v548 = vmul.f32 %v544, %v536
    %v549 = vmul.f32 %v545, %v537
    %v550 = vmul.f32 %v546, %v538
    %v551 = vmul.f32 %v547, %v539
    %v552 = vadd.f32 %v540, %v548
    %v553 = vadd.f32 %v541, %v549
    %v554 = vadd.f32 %v542, %v550
    %v555 = vadd.f32 %v543, %v551
    %v556 = vsub.f32 0.01, %v336
    %v557 = vsub.f32 0.01, %v337
    %v558 = vsub.f32 0.01, %v338
    %v559 = vsub.f32 0.01, %v339
    %v560 = vmax.f32 %v556, 0.0
    %v561 = vmax.f32 %v557, 0.0
    %v562 = vmax.f32 %v558, 0.0
    %v563 = vmax.f32 %v559, 0.0
    %v564 = vadd.f32 %v552, %v560
    %v565 = vadd.f32 %v553, %v561
    %v566 = vadd.f32 %v554, %v562
    %v567 = vadd.f32 %v555, %v563
    %s568 = sadd.s32 0, 0
    %s569 = smul.u32 %s568, 4096
    %s570 = sadd.s32 %s569, 4096
    %p571 = scmp.le.s32.totalorder %s570, 4096
    // Predicated region
    $region82: #{tpu_custom_call.1} parent=1 // pred_check
      %p572 = pneg %p571
    $region83: #{tpu_custom_call.1} parent=1 // pred_check_branch
      %574 = sbr.rel (%p572) target = $region85
    $region84: #{tpu_custom_call.1} parent=1 // pred_region
      %v575 = vld [vmem:[#allocation17] sm:$0xff]
      %v576 = vld [vmem:[#allocation17 + $0x8] sm:$0xff]
      %v577 = vld [vmem:[#allocation17 + $0x10] sm:$0xff]
      %v578 = vld [vmem:[#allocation17 + $0x18] sm:$0xff]
      %v579 = vadd.f32 %v575, %v564
      %v580 = vadd.f32 %v576, %v565
      %v581 = vadd.f32 %v577, %v566
      %v582 = vadd.f32 %v578, %v567
      %583 = vst [vmem:[#allocation17] sm:$0xff] %v579
      %584 = vst [vmem:[#allocation17 + $0x8] sm:$0xff] %v580
      %585 = vst [vmem:[#allocation17 + $0x10] sm:$0xff] %v581
      %586 = vst [vmem:[#allocation17 + $0x18] sm:$0xff] %v582
    $region85: #{tpu_custom_call.1} parent=1 // pred_fallthru
      _
    %p587 = scmp.gt.s32.totalorder %s570, 4096
    // Predicated region
    $region86: #{tpu_custom_call.1} parent=1 // pred_check
      %p588 = pneg %p587
    $region87: #{tpu_custom_call.1} parent=1 // pred_check_branch
      %590 = sbr.rel (%p588) target = $region89
    $region88: #{tpu_custom_call.1} parent=1 // pred_region
      %v591 = vlaneseq
      %v592 = vshrl.u32 %v591, 7
      %v593 = vadd.s32 %v592, 8
      %v594 = vadd.s32 %v592, 16
      %v595 = vadd.s32 %v592, 24
      %v596 = vlaneseq
      %v597 = vand.u32 %v596, 127
      %v598 = vmul.u32 %v592, 128
      %v599 = vmul.u32 %v593, 128
      %v600 = vmul.u32 %v594, 128
      %v601 = vmul.u32 %v595, 128
      %v602 = vstv %s569
      %v603 = vadd.s32 %v602, %v598
      %v604 = vadd.s32 %v602, %v599
      %v605 = vadd.s32 %v602, %v600
      %v606 = vadd.s32 %v602, %v601
      %v607 = vadd.s32 %v603, %v597
      %v608 = vadd.s32 %v604, %v597
      %v609 = vadd.s32 %v605, %v597
      %v610 = vadd.s32 %v606, %v597
      %vm611 = vcmp.lt.s32.totalorder %v607, 4096
      %vm612 = vcmp.lt.s32.totalorder %v608, 4096
      %vm613 = vcmp.lt.s32.totalorder %v609, 4096
      %vm614 = vcmp.lt.s32.totalorder %v610, 4096
      %v615 = vld [vmem:[#allocation17] sm:$0xff]
      %v616 = vld [vmem:[#allocation17 + $0x8] sm:$0xff]
      %v617 = vld [vmem:[#allocation17 + $0x10] sm:$0xff]
      %v618 = vld [vmem:[#allocation17 + $0x18] sm:$0xff]
      %v619 = vsel %vm611, %v564, 0.0
      %v620 = vsel %vm612, %v565, 0.0
      %v621 = vsel %vm613, %v566, 0.0
      %v622 = vsel %vm614, %v567, 0.0
      %v623 = vadd.f32 %v615, %v619
      %v624 = vadd.f32 %v616, %v620
      %v625 = vadd.f32 %v617, %v621
      %v626 = vadd.f32 %v618, %v622
      %627 = vst [vmem:[#allocation17] sm:$0xff] %v623
      %628 = vst [vmem:[#allocation17 + $0x8] sm:$0xff] %v624
      %629 = vst [vmem:[#allocation17 + $0x10] sm:$0xff] %v625
      %630 = vst [vmem:[#allocation17 + $0x18] sm:$0xff] %v626
    $region89: #{tpu_custom_call.1} parent=1 // pred_fallthru
      _
    // Predicated region
    $region90: #{tpu_custom_call.1} parent=1 // pred_check
      _
    $region91: #{tpu_custom_call.1} parent=1 // pred_check_branch
      %632 = sbr.rel (0) target = $region93
    $region92: #{tpu_custom_call.1} parent=1 // pred_region
      %s634 = ssub.s32 512, 512
      %635 = vsyncadd [#allocation4], %s634
      %s636 = sshll.u32 [#allocation17], 4
      %s637 = int_to_ptr.vmem [resolvable:$true] %s636
      %642 = dma.vmem_to_hbm [thread:$0]  %s637, 512, %s10, [#allocation4], 128, 128, 8
    $region93: #{tpu_custom_call.1} parent=1 // pred_fallthru
      _
    // Predicated region
    $region94: #{tpu_custom_call.1} parent=1 // pred_check
      _
    $region95: #{tpu_custom_call.1} parent=1 // pred_check_branch
      %644 = sbr.rel (0) target = $region97
    $region96: #{tpu_custom_call.1} parent=1 // pred_region
      %645 = dma.done [#allocation4], 512
    $region97: #{tpu_custom_call.1} parent=1 // pred_fallthru
      _
    %646 = vsyncpa [#allocation3], 1
    %647 = vsyncpa [#allocation6], 1
    %648 = vsyncpa [#allocation9], 1
    %649 = vsyncpa [#allocation12], 1
    %650 = vsyncpa [#allocation15], 1
    %651 = vsyncpa [#allocation4], 1

</llo_original>
